<compile_context>
chip_gen: v6e
topology: v6e:2x2x1
jax: 0.10.0
libtpu: 0.0.40
codegen_flags: <defaults>
</compile_context>

<pallas_src>
import functools

import jax
import jax.numpy as jnp
from jax import lax
from jax.experimental import pallas as pl
from jax.experimental.pallas import tpu as pltpu


def _round_up(x, m):
    return (x + m - 1) // m * m


def _min_sublane(dtype):
    # Minimum second-to-last tile dim for unmasked, unpacked accesses:
    # 8 rows for 32-bit dtypes, 16 for 16-bit, 32 for 8-bit.
    return max(8, 32 // jnp.dtype(dtype).itemsize)


def _pick_tile(dim, align, cap):
    """Largest multiple of `align` <= cap that divides `dim` (dim % align == 0)."""
    t = min(cap, dim)
    t -= t % align
    while t > align and dim % t != 0:
        t -= align
    return max(t, align)


def _contract(x, w, w_is_kn):
    # x: (tm, tk).  w: (tk, tn) if w_is_kn else (tn, tk) (PyTorch layout).
    if w_is_kn:
        dnums = (((1,), (0,)), ((), ()))      # MXU-native (tm,tk)@(tk,tn)
    else:
        dnums = (((1,), (1,)), ((), ()))      # rhs-transposed contraction
    return lax.dot_general(x, w, dimension_numbers=dnums,
                           preferred_element_type=jnp.float32)


def _dense_small_kernel(x_ref, w_ref, b_ref, o_ref, *, w_is_kn):
    acc = _contract(x_ref[...], w_ref[...], w_is_kn)
    o_ref[...] = (acc + b_ref[...].astype(jnp.float32)).astype(o_ref.dtype)


def _dense_tiled_kernel(x_ref, w_ref, b_ref, o_ref, *scratch, w_is_kn):
    # x_ref: (tm, tk), w_ref: (tn, tk) or (tk, tn), b_ref: (1, tn), o_ref: (tm, tn).
    # NOTE: the init/finalize pattern requires the K reduction axis to be the
    # LAST (fastest-varying) grid axis -- it is (grid = (i, j, k) below).
    acc_ref = scratch[0] if scratch else o_ref   # f32 output: accumulate in place
    k = pl.program_id(2)

    @pl.when(k == 0)
    def _():
        acc_ref[...] = jnp.zeros_like(acc_ref)

    acc_ref[...] += _contract(x_ref[...], w_ref[...], w_is_kn)

    @pl.when(k == pl.num_programs(2) - 1)
    def _():
        o_ref[...] = (acc_ref[...] + b_ref[...].astype(jnp.float32)).astype(
            o_ref.dtype)


@functools.partial(jax.jit,
                   static_argnames=("transposed_weight", "tm", "tn", "tk"))
def dense_forward(x, weight, bias, *, transposed_weight=False,
                  tm=None, tn=None, tk=None):
    """y = x @ W^T + b (PyTorch nn.Linear), reshaped to (B, D_out, 1, 1).

    x:      (B, D_in)
    weight: (D_out, D_in)  PyTorch layout              (transposed_weight=False)
            (D_in, D_out)  pre-transposed ONCE at parameter setup
                           (transposed_weight=True, MXU-native contraction)
    bias:   (D_out,)
    """
    B, D_in = x.shape
    D_out = weight.shape[1] if transposed_weight else weight.shape[0]
    out_dtype = x.dtype
    b2d = bias.reshape(1, D_out)

    # ---- Small-problem fast path: single block, no padding, no K loop. -----
    if (D_in * D_out <= 64 * 1024 and B * D_in <= 64 * 1024
            and B * D_out <= 64 * 1024):
        y = pl.pallas_call(
            functools.partial(_dense_small_kernel, w_is_kn=transposed_weight),
            out_shape=jax.ShapeDtypeStruct((B, D_out), out_dtype),
            grid=(1,),
            in_specs=[
                pl.BlockSpec((B, D_in), lambda i: (0, 0)),       # x (full)
                pl.BlockSpec(weight.shape, lambda i: (0, 0)),    # weight (full)
                pl.BlockSpec((1, D_out), lambda i: (0, 0)),      # bias (full)
            ],
            out_specs=pl.BlockSpec((B, D_out), lambda i: (0, 0)),
        )(x, weight, b2d)
        return y[:, :, None, None]

    # ---- Tiled path. -------------------------------------------------------
    sub = _min_sublane(out_dtype)
    Bp0 = _round_up(B, sub)
    Np0 = _round_up(D_out, 128)
    Kp0 = _round_up(D_in, 128)

    # Divisor-based tiles: no padding beyond the mandatory sublane/128
    # rounding; the pads / trailing slice below become no-ops when aligned.
    if tm is None:
        tm = _pick_tile(Bp0, sub, 256)
    if tn is None:
        tn = _pick_tile(Np0, 128, 512)
        # Megacore: if the whole problem is one (i, j) block, split the output
        # features so a "parallel" axis has >= 2 blocks (v7x: 2 TCs/chip).
        # Weight traffic is unchanged (disjoint slabs); only the x tile re-reads.
        if pl.cdiv(Bp0, tm) == 1 and Np0 // tn == 1 and Np0 >= 256:
            tn = _pick_tile(Np0, 128, Np0 // 2)
    if tk is None:
        tk = _pick_tile(Kp0, 128, 1024)

    Bp = _round_up(B, tm)
    Np = _round_up(D_out, tn)
    Kp = _round_up(D_in, tk)

    xp = x if (Bp, Kp) == (B, D_in) else jnp.pad(
        x, ((0, Bp - B), (0, Kp - D_in)))
    if transposed_weight:
        wp = (weight if (Kp, Np) == (D_in, D_out)
              else jnp.pad(weight, ((0, Kp - D_in), (0, Np - D_out))))
        w_spec = pl.BlockSpec((tk, tn), lambda i, j, k: (k, j))
    else:
        wp = (weight if (Np, Kp) == (D_out, D_in)
              else jnp.pad(weight, ((0, Np - D_out), (0, Kp - D_in))))
        w_spec = pl.BlockSpec((tn, tk), lambda i, j, k: (j, k))
    bp = b2d if Np == D_out else jnp.pad(b2d, ((0, 0), (0, Np - D_out)))

    grid = (Bp // tm, Np // tn, Kp // tk)   # K last => reduction axis fastest

    # f32 outputs accumulate directly in the resident output block; narrow
    # output dtypes get a separate f32 VMEM accumulator.
    needs_scratch = jnp.dtype(out_dtype) != jnp.dtype(jnp.float32)
    scratch = [pltpu.VMEM((tm, tn), jnp.float32)] if needs_scratch else []

    itemsize = jnp.dtype(out_dtype).itemsize
    footprint = 2 * (tm * tk + tk * tn + tm * tn) * itemsize + tm * tn * 4
    vmem_limit = int(max(32 * 1024 * 1024, min(2 * footprint, 96 * 1024 * 1024)))

    y = pl.pallas_call(
        functools.partial(_dense_tiled_kernel, w_is_kn=transposed_weight),
        out_shape=jax.ShapeDtypeStruct((Bp, Np), out_dtype),
        grid_spec=pltpu.PrefetchScalarGridSpec(
            num_scalar_prefetch=0,
            grid=grid,
            in_specs=[
                pl.BlockSpec((tm, tk), lambda i, j, k: (i, k)),   # x
                w_spec,                                           # weight
                pl.BlockSpec((1, tn), lambda i, j, k: (0, j)),    # bias
            ],
            out_specs=pl.BlockSpec((tm, tn), lambda i, j, k: (i, j)),
            scratch_shapes=scratch,
        ),
        compiler_params=pltpu.CompilerParams(
            dimension_semantics=("parallel", "parallel", "arbitrary"),
            vmem_limit_bytes=vmem_limit,
        ),
    )(xp, wp, bp)

    y = y[:B, :D_out]               # no-op when the tiles divide the dims
    return y[:, :, None, None]


if __name__ == "__main__":
    key = jax.random.PRNGKey(0)
    k_x, k_w, k_b = jax.random.split(key, 3)

    # Shapes implied by the module: Dense maps a (small) embedding vector to
    # per-channel values, e.g. input_dim=32 -> output_dim=4 channels.
    batch, input_dim, output_dim = 2, 32, 4

    x = jax.random.normal(k_x, (batch, input_dim), dtype=jnp.float32)
    bound = 1.0 / (input_dim ** 0.5)   # nn.Linear default init range
    weight = jax.random.uniform(k_w, (output_dim, input_dim),
                                minval=-bound, maxval=bound, dtype=jnp.float32)
    bias = jax.random.uniform(k_b, (output_dim,),
                              minval=-bound, maxval=bound, dtype=jnp.float32)

    y = dense_forward(x, weight, bias)
    jax.block_until_ready(y)
    y_ref = (x @ weight.T + bias)[:, :, None, None]
    assert y.shape == (batch, output_dim, 1, 1), y.shape
    assert jnp.allclose(y, y_ref, atol=1e-5, rtol=1e-5)

    # Exercise the tiled path. For these dims the divisor-based tiles mean
    # zero padding (previously the weight was blown up from 384x640 to 512x1024).
    k2x, k2w, k2b = jax.random.split(jax.random.PRNGKey(1), 3)
    B2, Din2, Dout2 = 96, 640, 384
    x2 = jax.random.normal(k2x, (B2, Din2), dtype=jnp.float32)
    w2 = jax.random.normal(k2w, (Dout2, Din2), dtype=jnp.float32) * 0.02
    b2 = jax.random.normal(k2b, (Dout2,), dtype=jnp.float32)
    y2_ref = (x2 @ w2.T + b2)[:, :, None, None]

    # PyTorch weight layout (rhs-transposed contraction in-kernel).
    y2 = dense_forward(x2, w2, b2)
    jax.block_until_ready(y2)
    assert jnp.allclose(y2, y2_ref, atol=1e-4, rtol=1e-4)

    # Pre-transposed weight layout (done ONCE at parameter setup in a real
    # model, not per forward call): MXU-native (tm,tk)@(tk,tn) contraction.
    w2_t = jnp.asarray(w2.T)
    y3 = dense_forward(x2, w2_t, b2, transposed_weight=True)
    jax.block_until_ready(y3)
    assert jnp.allclose(y3, y2_ref, atol=1e-4, rtol=1e-4)

    print("KERNEL_OK")
</pallas_src>

<mosaic_0001>
module attributes {stable_mosaic.version = 11 : i64} {
  func.func @_dense_small_kernel(%arg0: i32, %arg1: memref<2x32xf32, #tpu.memory_space<vmem>>, %arg2: memref<4x32xf32, #tpu.memory_space<vmem>>, %arg3: memref<1x4xf32, #tpu.memory_space<vmem>>, %arg4: memref<2x4xf32, #tpu.memory_space<vmem>>) attributes {dimension_semantics = [#tpu.dimension_semantics<arbitrary>], iteration_bounds = array<i64: 1>, scalar_prefetch = 0 : i64, scratch_operands = 0 : i64, tpu.core_type = #tpu.core_type<tc>, window_params = [{pipeline_mode = #tpu.pipeline_mode<synchronous>, transform_indices = @transform_0, window_bounds = array<i64: 2, 32>}, {pipeline_mode = #tpu.pipeline_mode<synchronous>, transform_indices = @transform_1, window_bounds = array<i64: 4, 32>}, {pipeline_mode = #tpu.pipeline_mode<synchronous>, transform_indices = @transform_2, window_bounds = array<i64: 1, 4>}, {pipeline_mode = #tpu.pipeline_mode<synchronous>, transform_indices = @transform_3, window_bounds = array<i64: 2, 4>}]} {
    %c0 = arith.constant 0 : index
    %c0_0 = arith.constant 0 : index
    %0 = vector.load %arg1[%c0, %c0_0] : memref<2x32xf32, #tpu.memory_space<vmem>>, vector<2x32xf32>
    %c0_1 = arith.constant 0 : index
    %c0_2 = arith.constant 0 : index
    %1 = vector.load %arg2[%c0_1, %c0_2] : memref<4x32xf32, #tpu.memory_space<vmem>>, vector<4x32xf32>
    %cst = arith.constant dense<0.000000e+00> : vector<2x4xf32>
    %2 = tpu.matmul %0, %1, %cst {dimension_numbers = #tpu.dot_dimension_numbers<[1], [1], [0], [0], [0, 0, 1, 0], [], []>} : vector<2x32xf32>, vector<4x32xf32>, vector<2x4xf32> -> vector<2x4xf32>
    %c0_3 = arith.constant 0 : index
    %c0_4 = arith.constant 0 : index
    %3 = vector.load %arg3[%c0_3, %c0_4] : memref<1x4xf32, #tpu.memory_space<vmem>>, vector<1x4xf32>
    %4 = vector.broadcast %3 : vector<1x4xf32> to vector<2x4xf32>
    %5 = arith.addf %2, %4 : vector<2x4xf32>
    %c0_5 = arith.constant 0 : index
    %c0_6 = arith.constant 0 : index
    %6 = vector.load %arg4[%c0_5, %c0_6] : memref<2x4xf32, #tpu.memory_space<vmem>>, vector<2x4xf32>
    tpu.vector_store %arg4[%c0_5, %c0_6], %5 {strides = array<i32>} : memref<2x4xf32, #tpu.memory_space<vmem>>, vector<2x4xf32>,
    return
  }
  func.func @transform_0(%arg0: i32) -> (i32, i32) {
    %c0_i32 = arith.constant 0 : i32
    %c0_i32_0 = arith.constant 0 : i32
    %c0_i32_1 = arith.constant 0 : i32
    return %c0_i32, %c0_i32_0 : i32, i32
  }
  func.func @transform_1(%arg0: i32) -> (i32, i32) {
    %c0_i32 = arith.constant 0 : i32
    %c0_i32_0 = arith.constant 0 : i32
    %c0_i32_1 = arith.constant 0 : i32
    return %c0_i32, %c0_i32_0 : i32, i32
  }
  func.func @transform_2(%arg0: i32) -> (i32, i32) {
    %c0_i32 = arith.constant 0 : i32
    %c0_i32_0 = arith.constant 0 : i32
    %c0_i32_1 = arith.constant 0 : i32
    return %c0_i32, %c0_i32_0 : i32, i32
  }
  func.func @transform_3(%arg0: i32) -> (i32, i32) {
    %c0_i32 = arith.constant 0 : i32
    %c0_i32_0 = arith.constant 0 : i32
    %c0_i32_1 = arith.constant 0 : i32
    return %c0_i32, %c0_i32_0 : i32, i32
  }
}

</mosaic_0001>

<llo_original>
// kernel: dense_forward.1
$region0: #{dense_forward.1}
  #allocation0 [shape = 'u32[]', space=smem, size = 0x4, offset = 0x4, fixed_abs, tag = 'smem constant byte address 0x4 - core index']
  #allocation1 [shape = 'u32[144,128]{1,0:T(1,128)}', space=vmem, size = 0x12000, scoped, tag = 'internal scratch']
  %s0 = inlined_call_operand.hbm [shape: f32[2,32], index: 0, kind: input, shape index: {}]
  %s1 = inlined_call_operand.hbm [shape: f32[4,32], index: 1, kind: input, shape index: {}]
  %s2 = inlined_call_operand.vmem [shape: f32[1,4], index: 2, kind: input, shape index: {}]
  %s3 = inlined_call_operand.hbm [shape: f32[2,4], index: 3, kind: output, shape index: {}]
  %s4 = sld [smem:[#allocation0]]
  $region30: #{dense_forward.1} parent=0
    _
  %s6 = ssub.s32 1, %s4
  %s7 = scalar_select 0, %s6, %s4
  $region1: #{dense_forward.1} parent=0
    #allocation2 [shape = 'u8[1024]{0}', space=vmem, size = 0x400, scoped, tag = 'input window, operand 0, single buffered']
    #allocation3 [shape = 's32[1]{0}', space=sflag, size = 0x4, scoped, tag = 'scoped memory for dense_forward.1']
    #allocation4 [shape = 's32[1]{0}', space=sflag, size = 0x4, scoped, tag = 'scoped memory for dense_forward.1']
    #allocation5 [shape = 'u8[2048]{0}', space=vmem, size = 0x800, scoped, tag = 'input window, operand 1, single buffered']
    #allocation6 [shape = 's32[1]{0}', space=sflag, size = 0x4, scoped, tag = 'scoped memory for dense_forward.1']
    #allocation7 [shape = 'u8[1024]{0}', space=vmem, size = 0x400, scoped, tag = 'output window, operand 0, single buffered']
    %8 = vsyncpa [#allocation3], 0
    %9 = vsyncpa [#allocation6], 0
    %10 = vsyncpa [#allocation4], 0
    // Predicated region
    $region2: #{dense_forward.1} parent=1 // pred_check
      _
    $region3: #{dense_forward.1} parent=1 // pred_check_branch
      %12 = sbr.rel (0) target = $region5
    $region4: #{dense_forward.1} parent=1 // pred_region
      %s14 = ssub.s32 32, 32
      %15 = vsyncadd [#allocation3], %s14
      %s17 = sshll.u32 [#allocation2], 4
      %s18 = int_to_ptr.vmem [resolvable:$true] %s17
      %20 = dma.hbm_to_vmem [thread:$0]  %s0, 32, %s18, [#allocation3]
    $region5: #{dense_forward.1} parent=1 // pred_fallthru
      _
    // Predicated region
    $region6: #{dense_forward.1} parent=1 // pred_check
      _
    $region7: #{dense_forward.1} parent=1 // pred_check_branch
      %22 = sbr.rel (0) target = $region9
    $region8: #{dense_forward.1} parent=1 // pred_region
      %s24 = ssub.s32 64, 64
      %25 = vsyncadd [#allocation6], %s24
      %s27 = sshll.u32 [#allocation5], 4
      %s28 = int_to_ptr.vmem [resolvable:$true] %s27
      %30 = dma.hbm_to_vmem [thread:$0]  %s1, 64, %s28, [#allocation6]
    $region9: #{dense_forward.1} parent=1 // pred_fallthru
      _
    // Predicated region
    $region10: #{dense_forward.1} parent=1 // pred_check
      _
    $region11: #{dense_forward.1} parent=1 // pred_check_branch
      %32 = sbr.rel (0) target = $region13
    $region12: #{dense_forward.1} parent=1 // pred_region
      _
    $region13: #{dense_forward.1} parent=1 // pred_fallthru
      _
    // Predicated region
    $region14: #{dense_forward.1} parent=1 // pred_check
      _
    $region15: #{dense_forward.1} parent=1 // pred_check_branch
      %34 = sbr.rel (0) target = $region17
    $region16: #{dense_forward.1} parent=1 // pred_region
      %35 = dma.done [#allocation3], 32
    $region17: #{dense_forward.1} parent=1 // pred_fallthru
      _
    // Predicated region
    $region18: #{dense_forward.1} parent=1 // pred_check
      _
    $region19: #{dense_forward.1} parent=1 // pred_check_branch
      %37 = sbr.rel (0) target = $region21
    $region20: #{dense_forward.1} parent=1 // pred_region
      %38 = dma.done [#allocation6], 64
    $region21: #{dense_forward.1} parent=1 // pred_fallthru
      _
    %v39 = vld [vmem:[#allocation2] sm:$0x3]
    %v40 = vld [vmem:[#allocation5] sm:$0xf]
    %v41 = vld [vmem:[%s2] sm:$0x1]
    %v43 = vlaneseq
    %v44 = vshrl.u32 %v43, 7
    %v45 = vsub.s32 0, %v44
    %v46 = vrot.slane %v41, %v45
    %vm48 = vcmask 261120
    %v50 = vsel %vm48, %v39, 0
    %v53 = vsel %vm48, %v40, 0
    %55 = vmatprep.subr.mxu0 0.0
    %56 = vmatpush1.xpose.msra.mxu0 0.0
    %57 = vmatprep.subr.mxu0 0.0
    %58 = vmatpush1.xpose.msra.mxu0 0.0
    %59 = vmatprep.subr.mxu0 0.0
    %60 = vmatpush1.xpose.msra.mxu0 0.0
    %61 = vmatprep.subr.mxu0 0.0
    %62 = vmatpush1.xpose.msra.mxu0 0.0
    %63 = vmatprep.subr.mxu0 0.0
    %64 = vmatpush1.xpose.msra.mxu0 0.0
    %65 = vmatprep.subr.mxu0 0.0
    %66 = vmatpush1.xpose.msra.mxu0 0.0
    %67 = vmatprep.subr.mxu0 0.0
    %68 = vmatpush1.xpose.msra.mxu0 0.0
    %69 = vmatprep.subr.mxu0 0.0
    %70 = vmatpush1.xpose.msra.mxu0 0.0
    %71 = vmatprep.subr.mxu0 0.0
    %72 = vmatpush1.xpose.msra.mxu0 0.0
    %73 = vmatprep.subr.mxu0 0.0
    %74 = vmatpush1.xpose.msra.mxu0 0.0
    %75 = vmatprep.subr.mxu0 0.0
    %76 = vmatpush1.xpose.msra.mxu0 0.0
    %77 = vmatprep.subr.mxu0 0.0
    %78 = vmatpush1.xpose.msra.mxu0 0.0
    %79 = vmatprep.subr.mxu0 0.0
    %80 = vmatpush1.xpose.msra.mxu0 0.0
    %81 = vmatprep.subr.mxu0 0.0
    %82 = vmatpush1.xpose.msra.mxu0 0.0
    %83 = vmatprep.subr.mxu0 0.0
    %84 = vmatpush1.xpose.msra.mxu0 0.0
    %85 = vmatprep.subr.mxu0 0.0
    %86 = vmatpush1.xpose.msra.mxu0 %v53
    %87 = vmatprep.subr.mxu0 0.0
    %88 = vmatpush2.xpose.msra.mxu0 0.0
    %89 = vmatprep.subr.mxu0 0.0
    %90 = vmatpush2.xpose.msra.mxu0 0.0
    %91 = vmatprep.subr.mxu0 0.0
    %92 = vmatpush2.xpose.msra.mxu0 0.0
    %93 = vmatprep.subr.mxu0 0.0
    %94 = vmatpush2.xpose.msra.mxu0 0.0
    %95 = vmatprep.subr.mxu0 0.0
    %96 = vmatpush2.xpose.msra.mxu0 0.0
    %97 = vmatprep.subr.mxu0 0.0
    %98 = vmatpush2.xpose.msra.mxu0 0.0
    %99 = vmatprep.subr.mxu0 0.0
    %100 = vmatpush2.xpose.msra.mxu0 0.0
    %101 = vmatprep.subr.mxu0 0.0
    %102 = vmatpush2.xpose.msra.mxu0 0.0
    %103 = vmatprep.subr.mxu0 0.0
    %104 = vmatpush2.xpose.msra.mxu0 0.0
    %105 = vmatprep.subr.mxu0 0.0
    %106 = vmatpush2.xpose.msra.mxu0 0.0
    %107 = vmatprep.subr.mxu0 0.0
    %108 = vmatpush2.xpose.msra.mxu0 0.0
    %109 = vmatprep.subr.mxu0 0.0
    %110 = vmatpush2.xpose.msra.mxu0 0.0
    %111 = vmatprep.subr.mxu0 0.0
    %112 = vmatpush2.xpose.msra.mxu0 0.0
    %113 = vmatprep.subr.mxu0 0.0
    %114 = vmatpush2.xpose.msra.mxu0 0.0
    %115 = vmatprep.subr.mxu0 0.0
    %116 = vmatpush2.xpose.msra.mxu0 0.0
    %117 = vmatprep.subr.mxu0 0.0
    %118 = vmatpush2.xpose.msra.mxu0 0.0
    %119 = vmatprep.mubr.f32.mxu0 0.0
    %120 = vmatmul.mubr.f32.gmra.mxu0 %v50
    %v121 = vpop.f32.mrf.mxu0
    %v122 = vadd.f32 %v46, %v121
    %v123 = vpop.f32.mrf.mxu0
    %124 = vdwg.mxu0
    %vm125 = vcmask 25600
    %126 = vst.msk [vmem:[#allocation7] sm:$0x3] %vm125, %v122
    // Predicated region
    $region22: #{dense_forward.1} parent=1 // pred_check
      _
    $region23: #{dense_forward.1} parent=1 // pred_check_branch
      %128 = sbr.rel (0) target = $region25
    $region24: #{dense_forward.1} parent=1 // pred_region
      %s130 = ssub.s32 32, 32
      %131 = vsyncadd [#allocation4], %s130
      %s133 = sshll.u32 [#allocation7], 4
      %s134 = int_to_ptr.vmem [resolvable:$true] %s133
      %136 = dma.vmem_to_hbm [thread:$0]  %s134, 32, %s3, [#allocation4]
    $region25: #{dense_forward.1} parent=1 // pred_fallthru
      _
    // Predicated region
    $region26: #{dense_forward.1} parent=1 // pred_check
      _
    $region27: #{dense_forward.1} parent=1 // pred_check_branch
      %138 = sbr.rel (0) target = $region29
    $region28: #{dense_forward.1} parent=1 // pred_region
      %139 = dma.done [#allocation4], 32
    $region29: #{dense_forward.1} parent=1 // pred_fallthru
      _
    %140 = vsyncpa [#allocation3], 1
    %141 = vsyncpa [#allocation6], 1
    %142 = vsyncpa [#allocation4], 1

</llo_original>
